<compile_context>
chip_gen: v7x
topology: tpu7x:2x2x1
jax: 0.10.0
libtpu: 0.0.40
codegen_flags: <defaults>
</compile_context>

<pallas_src>
import jax
import jax.numpy as jnp
from jax import lax
from jax.experimental import pallas as pl
from jax.experimental.pallas import tpu as pltpu


def lstm_net_kernel(xw_ref, w_hh_ref, w_lin_ref, b_lin_ref, out_ref):
    # xw_ref:   (T, B, 4H)  precomputed x @ w_ih + bias, time-major
    # w_hh_ref: (H, 4H)
    # w_lin_ref:(H, 1)
    # b_lin_ref:(1, 1)  in SMEM
    # out_ref:  (B, 1)
    T = xw_ref.shape[0]
    B = xw_ref.shape[1]
    H = w_hh_ref.shape[0]

    w_hh = w_hh_ref[...]  # load the recurrent weights once, outside the loop

    def step(t, carry):
        h, c = carry
        # Only one MXU push on the serial path per timestep.
        gates = xw_ref[t] + jnp.dot(h, w_hh, preferred_element_type=jnp.float32)
        # PyTorch gate order [i, f, g, o]; at H=32 the 4H axis is exactly one
        # 128-lane vreg, so the 32-lane gate sub-slices are cheap XLU filler.
        i_g = jax.nn.sigmoid(gates[:, 0 * H:1 * H])
        f_g = jax.nn.sigmoid(gates[:, 1 * H:2 * H])
        g_g = jnp.tanh(gates[:, 2 * H:3 * H])
        o_g = jax.nn.sigmoid(gates[:, 3 * H:4 * H])
        c_new = f_g * c + i_g * g_g
        h_new = o_g * jnp.tanh(c_new)
        return (h_new, c_new)

    h0 = jnp.zeros((B, H), jnp.float32)
    c0 = jnp.zeros((B, H), jnp.float32)
    # T is a static Python int; fully unroll the short recurrence so successive
    # steps' EUP/MXU work can overlap.
    h_last, _ = lax.fori_loop(0, T, step, (h0, c0), unroll=True)

    out_ref[...] = (
        jnp.dot(h_last, w_lin_ref[...], preferred_element_type=jnp.float32)
        + b_lin_ref[0, 0]
    )


def net_forward(x, params):
    """x: (B, T, F) float32 (batch_first, like PyTorch). Returns (B, 1)."""
    B, T, F = x.shape
    w_ih_t, w_hh_t, b, w_lin_t, b_lin = params
    H = w_hh_t.shape[0]

    # Hoist the input projection out of the recurrence: one (T*B, F) x (F, 4H)
    # matmul with far better MXU occupancy than T tiny per-step matmuls, and
    # the output is produced directly time-major (no separate transpose pass).
    xw = jnp.einsum("btf,fg->tbg", x, w_ih_t) + b  # (T, B, 4H)

    vmem = pl.BlockSpec(memory_space=pltpu.MemorySpace.VMEM)
    smem = pl.BlockSpec(memory_space=pltpu.MemorySpace.SMEM)
    out = pl.pallas_call(
        lstm_net_kernel,
        out_shape=jax.ShapeDtypeStruct((B, 1), jnp.float32),
        in_specs=[vmem, vmem, vmem, smem],
        out_specs=vmem,
    )(xw, w_hh_t, w_lin_t, b_lin)
    return out


def init_params(key, input_size, hidden_size):
    """Deterministic init matching PyTorch shapes: U(-1/sqrt(H), 1/sqrt(H))."""
    k = 1.0 / jnp.sqrt(jnp.float32(hidden_size))
    keys = jax.random.split(key, 6)
    # PyTorch-native shapes
    w_ih = jax.random.uniform(keys[0], (4 * hidden_size, input_size), jnp.float32, -k, k)
    w_hh = jax.random.uniform(keys[1], (4 * hidden_size, hidden_size), jnp.float32, -k, k)
    b_ih = jax.random.uniform(keys[2], (4 * hidden_size,), jnp.float32, -k, k)
    b_hh = jax.random.uniform(keys[3], (4 * hidden_size,), jnp.float32, -k, k)
    w_lin = jax.random.uniform(keys[4], (1, hidden_size), jnp.float32, -k, k)
    b_lin = jax.random.uniform(keys[5], (1,), jnp.float32, -k, k)
    # Kernel-layout (right-multiply) forms
    return (
        w_ih.T,                                     # (F, 4H)
        w_hh.T,                                     # (H, 4H)
        (b_ih + b_hh).reshape(1, 4 * hidden_size),  # (1, 4H)
        w_lin.T,                                    # (H, 1)
        b_lin.reshape(1, 1),                        # (1, 1)
    )


def net_forward_ref(x, params):
    """Pure-JAX reference of the same forward, for validation."""
    w_ih_t, w_hh_t, b, w_lin_t, b_lin = params
    B, T, F = x.shape
    H = w_hh_t.shape[0]
    h = jnp.zeros((B, H), jnp.float32)
    c = jnp.zeros((B, H), jnp.float32)
    for t in range(T):
        gates = x[:, t, :] @ w_ih_t + h @ w_hh_t + b
        i_g = jax.nn.sigmoid(gates[:, 0 * H:1 * H])
        f_g = jax.nn.sigmoid(gates[:, 1 * H:2 * H])
        g_g = jnp.tanh(gates[:, 2 * H:3 * H])
        o_g = jax.nn.sigmoid(gates[:, 3 * H:4 * H])
        c = f_g * c + i_g * g_g
        h = o_g * jnp.tanh(c)
    return h @ w_lin_t + b_lin


if __name__ == "__main__":
    # Small shapes consistent with the module: batch=2, seq=8, features=8, hidden=32.
    B, T, F, H = 2, 8, 8, 32

    key = jax.random.PRNGKey(0)
    kx, kp = jax.random.split(key)
    x = jax.random.normal(kx, (B, T, F), jnp.float32)
    params = init_params(kp, input_size=F, hidden_size=H)

    out = net_forward(x, params)
    out = jax.block_until_ready(out)

    ref = net_forward_ref(x, params)
    assert out.shape == (B, 1)
    assert jnp.allclose(out, ref, atol=1e-5, rtol=1e-5), (out, ref)

    print("KERNEL_OK")
</pallas_src>

<mosaic_0001>
module attributes {stable_mosaic.version = 11 : i64} {
  func.func @lstm_net_kernel(%arg0: memref<8x2x128xf32, #tpu.memory_space<vmem>>, %arg1: memref<32x128xf32, #tpu.memory_space<vmem>>, %arg2: memref<32x1xf32, #tpu.memory_space<vmem>>, %arg3: memref<1x1xf32, #tpu.memory_space<smem>>, %arg4: memref<2x1xf32, #tpu.memory_space<vmem>>) attributes {dimension_semantics = [], scalar_prefetch = 0 : i64, scratch_operands = 0 : i64, tpu.core_type = #tpu.core_type<tc>} {
    %c0 = arith.constant 0 : index
    %c0_0 = arith.constant 0 : index
    %0 = vector.load %arg1[%c0, %c0_0] : memref<32x128xf32, #tpu.memory_space<vmem>>, vector<32x128xf32>
    %cst = arith.constant 0.000000e+00 : f32
    %1 = vector.broadcast %cst : f32 to vector<2x32xf32>
    %cst_1 = arith.constant 0.000000e+00 : f32
    %2 = vector.broadcast %cst_1 : f32 to vector<2x32xf32>
    %c0_i32 = arith.constant 0 : i32
    %3 = arith.index_cast %c0_i32 : i32 to index
    %c0_2 = arith.constant 0 : index
    %c0_3 = arith.constant 0 : index
    %4 = vector.load %arg0[%3, %c0_2, %c0_3] : memref<8x2x128xf32, #tpu.memory_space<vmem>>, vector<1x2x128xf32>
    %5 = vector.shape_cast %4 : vector<1x2x128xf32> to vector<2x128xf32>
    %cst_4 = arith.constant dense<0.000000e+00> : vector<2x128xf32>
    %6 = tpu.matmul %1, %0, %cst_4 {dimension_numbers = #tpu.dot_dimension_numbers<[1], [0], [0], [1], [0, 0, 1, 1], [], []>} : vector<2x32xf32>, vector<32x128xf32>, vector<2x128xf32> -> vector<2x128xf32>
    %7 = arith.addf %5, %6 : vector<2x128xf32>
    %8 = vector.extract_strided_slice %7 {offsets = [0, 0], sizes = [2, 32], strides = [1, 1]} : vector<2x128xf32> to vector<2x32xf32>
    %9 = arith.negf %8 : vector<2x32xf32>
    %10 = math.exp %9 : vector<2x32xf32>
    %cst_5 = arith.constant 1.000000e+00 : f32
    %11 = vector.broadcast %cst_5 : f32 to vector<2x32xf32>
    %12 = arith.addf %11, %10 : vector<2x32xf32>
    %13 = arith.divf %11, %12 : vector<2x32xf32>
    %14 = vector.extract_strided_slice %7 {offsets = [0, 32], sizes = [2, 32], strides = [1, 1]} : vector<2x128xf32> to vector<2x32xf32>
    %15 = arith.negf %14 : vector<2x32xf32>
    %16 = math.exp %15 : vector<2x32xf32>
    %cst_6 = arith.constant 1.000000e+00 : f32
    %17 = vector.broadcast %cst_6 : f32 to vector<2x32xf32>
    %18 = arith.addf %17, %16 : vector<2x32xf32>
    %19 = arith.divf %17, %18 : vector<2x32xf32>
    %20 = vector.extract_strided_slice %7 {offsets = [0, 64], sizes = [2, 32], strides = [1, 1]} : vector<2x128xf32> to vector<2x32xf32>
    %21 = math.tanh %20 : vector<2x32xf32>
    %22 = vector.extract_strided_slice %7 {offsets = [0, 96], sizes = [2, 32], strides = [1, 1]} : vector<2x128xf32> to vector<2x32xf32>
    %23 = arith.negf %22 : vector<2x32xf32>
    %24 = math.exp %23 : vector<2x32xf32>
    %cst_7 = arith.constant 1.000000e+00 : f32
    %25 = vector.broadcast %cst_7 : f32 to vector<2x32xf32>
    %26 = arith.addf %25, %24 : vector<2x32xf32>
    %27 = arith.divf %25, %26 : vector<2x32xf32>
    %28 = arith.mulf %19, %2 : vector<2x32xf32>
    %29 = arith.mulf %13, %21 : vector<2x32xf32>
    %30 = arith.addf %28, %29 : vector<2x32xf32>
    %31 = math.tanh %30 : vector<2x32xf32>
    %32 = arith.mulf %27, %31 : vector<2x32xf32>
    %c1_i32 = arith.constant 1 : i32
    %33 = arith.index_cast %c1_i32 : i32 to index
    %c0_8 = arith.constant 0 : index
    %c0_9 = arith.constant 0 : index
    %34 = vector.load %arg0[%33, %c0_8, %c0_9] : memref<8x2x128xf32, #tpu.memory_space<vmem>>, vector<1x2x128xf32>
    %35 = vector.shape_cast %34 : vector<1x2x128xf32> to vector<2x128xf32>
    %cst_10 = arith.constant dense<0.000000e+00> : vector<2x128xf32>
    %36 = tpu.matmul %32, %0, %cst_10 {dimension_numbers = #tpu.dot_dimension_numbers<[1], [0], [0], [1], [0, 0, 1, 1], [], []>} : vector<2x32xf32>, vector<32x128xf32>, vector<2x128xf32> -> vector<2x128xf32>
    %37 = arith.addf %35, %36 : vector<2x128xf32>
    %38 = vector.extract_strided_slice %37 {offsets = [0, 0], sizes = [2, 32], strides = [1, 1]} : vector<2x128xf32> to vector<2x32xf32>
    %39 = arith.negf %38 : vector<2x32xf32>
    %40 = math.exp %39 : vector<2x32xf32>
    %cst_11 = arith.constant 1.000000e+00 : f32
    %41 = vector.broadcast %cst_11 : f32 to vector<2x32xf32>
    %42 = arith.addf %41, %40 : vector<2x32xf32>
    %43 = arith.divf %41, %42 : vector<2x32xf32>
    %44 = vector.extract_strided_slice %37 {offsets = [0, 32], sizes = [2, 32], strides = [1, 1]} : vector<2x128xf32> to vector<2x32xf32>
    %45 = arith.negf %44 : vector<2x32xf32>
    %46 = math.exp %45 : vector<2x32xf32>
    %cst_12 = arith.constant 1.000000e+00 : f32
    %47 = vector.broadcast %cst_12 : f32 to vector<2x32xf32>
    %48 = arith.addf %47, %46 : vector<2x32xf32>
    %49 = arith.divf %47, %48 : vector<2x32xf32>
    %50 = vector.extract_strided_slice %37 {offsets = [0, 64], sizes = [2, 32], strides = [1, 1]} : vector<2x128xf32> to vector<2x32xf32>
    %51 = math.tanh %50 : vector<2x32xf32>
    %52 = vector.extract_strided_slice %37 {offsets = [0, 96], sizes = [2, 32], strides = [1, 1]} : vector<2x128xf32> to vector<2x32xf32>
    %53 = arith.negf %52 : vector<2x32xf32>
    %54 = math.exp %53 : vector<2x32xf32>
    %cst_13 = arith.constant 1.000000e+00 : f32
    %55 = vector.broadcast %cst_13 : f32 to vector<2x32xf32>
    %56 = arith.addf %55, %54 : vector<2x32xf32>
    %57 = arith.divf %55, %56 : vector<2x32xf32>
    %58 = arith.mulf %49, %30 : vector<2x32xf32>
    %59 = arith.mulf %43, %51 : vector<2x32xf32>
    %60 = arith.addf %58, %59 : vector<2x32xf32>
    %61 = math.tanh %60 : vector<2x32xf32>
    %62 = arith.mulf %57, %61 : vector<2x32xf32>
    %c2_i32 = arith.constant 2 : i32
    %63 = arith.index_cast %c2_i32 : i32 to index
    %c0_14 = arith.constant 0 : index
    %c0_15 = arith.constant 0 : index
    %64 = vector.load %arg0[%63, %c0_14, %c0_15] : memref<8x2x128xf32, #tpu.memory_space<vmem>>, vector<1x2x128xf32>
    %65 = vector.shape_cast %64 : vector<1x2x128xf32> to vector<2x128xf32>
    %cst_16 = arith.constant dense<0.000000e+00> : vector<2x128xf32>
    %66 = tpu.matmul %62, %0, %cst_16 {dimension_numbers = #tpu.dot_dimension_numbers<[1], [0], [0], [1], [0, 0, 1, 1], [], []>} : vector<2x32xf32>, vector<32x128xf32>, vector<2x128xf32> -> vector<2x128xf32>
    %67 = arith.addf %65, %66 : vector<2x128xf32>
    %68 = vector.extract_strided_slice %67 {offsets = [0, 0], sizes = [2, 32], strides = [1, 1]} : vector<2x128xf32> to vector<2x32xf32>
    %69 = arith.negf %68 : vector<2x32xf32>
    %70 = math.exp %69 : vector<2x32xf32>
    %cst_17 = arith.constant 1.000000e+00 : f32
    %71 = vector.broadcast %cst_17 : f32 to vector<2x32xf32>
    %72 = arith.addf %71, %70 : vector<2x32xf32>
    %73 = arith.divf %71, %72 : vector<2x32xf32>
    %74 = vector.extract_strided_slice %67 {offsets = [0, 32], sizes = [2, 32], strides = [1, 1]} : vector<2x128xf32> to vector<2x32xf32>
    %75 = arith.negf %74 : vector<2x32xf32>
    %76 = math.exp %75 : vector<2x32xf32>
    %cst_18 = arith.constant 1.000000e+00 : f32
    %77 = vector.broadcast %cst_18 : f32 to vector<2x32xf32>
    %78 = arith.addf %77, %76 : vector<2x32xf32>
    %79 = arith.divf %77, %78 : vector<2x32xf32>
    %80 = vector.extract_strided_slice %67 {offsets = [0, 64], sizes = [2, 32], strides = [1, 1]} : vector<2x128xf32> to vector<2x32xf32>
    %81 = math.tanh %80 : vector<2x32xf32>
    %82 = vector.extract_strided_slice %67 {offsets = [0, 96], sizes = [2, 32], strides = [1, 1]} : vector<2x128xf32> to vector<2x32xf32>
    %83 = arith.negf %82 : vector<2x32xf32>
    %84 = math.exp %83 : vector<2x32xf32>
    %cst_19 = arith.constant 1.000000e+00 : f32
    %85 = vector.broadcast %cst_19 : f32 to vector<2x32xf32>
    %86 = arith.addf %85, %84 : vector<2x32xf32>
    %87 = arith.divf %85, %86 : vector<2x32xf32>
    %88 = arith.mulf %79, %60 : vector<2x32xf32>
    %89 = arith.mulf %73, %81 : vector<2x32xf32>
    %90 = arith.addf %88, %89 : vector<2x32xf32>
    %91 = math.tanh %90 : vector<2x32xf32>
    %92 = arith.mulf %87, %91 : vector<2x32xf32>
    %c3_i32 = arith.constant 3 : i32
    %93 = arith.index_cast %c3_i32 : i32 to index
    %c0_20 = arith.constant 0 : index
    %c0_21 = arith.constant 0 : index
    %94 = vector.load %arg0[%93, %c0_20, %c0_21] : memref<8x2x128xf32, #tpu.memory_space<vmem>>, vector<1x2x128xf32>
    %95 = vector.shape_cast %94 : vector<1x2x128xf32> to vector<2x128xf32>
    %cst_22 = arith.constant dense<0.000000e+00> : vector<2x128xf32>
    %96 = tpu.matmul %92, %0, %cst_22 {dimension_numbers = #tpu.dot_dimension_numbers<[1], [0], [0], [1], [0, 0, 1, 1], [], []>} : vector<2x32xf32>, vector<32x128xf32>, vector<2x128xf32> -> vector<2x128xf32>
    %97 = arith.addf %95, %96 : vector<2x128xf32>
    %98 = vector.extract_strided_slice %97 {offsets = [0, 0], sizes = [2, 32], strides = [1, 1]} : vector<2x128xf32> to vector<2x32xf32>
    %99 = arith.negf %98 : vector<2x32xf32>
    %100 = math.exp %99 : vector<2x32xf32>
    %cst_23 = arith.constant 1.000000e+00 : f32
    %101 = vector.broadcast %cst_23 : f32 to vector<2x32xf32>
    %102 = arith.addf %101, %100 : vector<2x32xf32>
    %103 = arith.divf %101, %102 : vector<2x32xf32>
    %104 = vector.extract_strided_slice %97 {offsets = [0, 32], sizes = [2, 32], strides = [1, 1]} : vector<2x128xf32> to vector<2x32xf32>
    %105 = arith.negf %104 : vector<2x32xf32>
    %106 = math.exp %105 : vector<2x32xf32>
    %cst_24 = arith.constant 1.000000e+00 : f32
    %107 = vector.broadcast %cst_24 : f32 to vector<2x32xf32>
    %108 = arith.addf %107, %106 : vector<2x32xf32>
    %109 = arith.divf %107, %108 : vector<2x32xf32>
    %110 = vector.extract_strided_slice %97 {offsets = [0, 64], sizes = [2, 32], strides = [1, 1]} : vector<2x128xf32> to vector<2x32xf32>
    %111 = math.tanh %110 : vector<2x32xf32>
    %112 = vector.extract_strided_slice %97 {offsets = [0, 96], sizes = [2, 32], strides = [1, 1]} : vector<2x128xf32> to vector<2x32xf32>
    %113 = arith.negf %112 : vector<2x32xf32>
    %114 = math.exp %113 : vector<2x32xf32>
    %cst_25 = arith.constant 1.000000e+00 : f32
    %115 = vector.broadcast %cst_25 : f32 to vector<2x32xf32>
    %116 = arith.addf %115, %114 : vector<2x32xf32>
    %117 = arith.divf %115, %116 : vector<2x32xf32>
    %118 = arith.mulf %109, %90 : vector<2x32xf32>
    %119 = arith.mulf %103, %111 : vector<2x32xf32>
    %120 = arith.addf %118, %119 : vector<2x32xf32>
    %121 = math.tanh %120 : vector<2x32xf32>
    %122 = arith.mulf %117, %121 : vector<2x32xf32>
    %c4_i32 = arith.constant 4 : i32
    %123 = arith.index_cast %c4_i32 : i32 to index
    %c0_26 = arith.constant 0 : index
    %c0_27 = arith.constant 0 : index
    %124 = vector.load %arg0[%123, %c0_26, %c0_27] : memref<8x2x128xf32, #tpu.memory_space<vmem>>, vector<1x2x128xf32>
    %125 = vector.shape_cast %124 : vector<1x2x128xf32> to vector<2x128xf32>
    %cst_28 = arith.constant dense<0.000000e+00> : vector<2x128xf32>
    %126 = tpu.matmul %122, %0, %cst_28 {dimension_numbers = #tpu.dot_dimension_numbers<[1], [0], [0], [1], [0, 0, 1, 1], [], []>} : vector<2x32xf32>, vector<32x128xf32>, vector<2x128xf32> -> vector<2x128xf32>
    %127 = arith.addf %125, %126 : vector<2x128xf32>
    %128 = vector.extract_strided_slice %127 {offsets = [0, 0], sizes = [2, 32], strides = [1, 1]} : vector<2x128xf32> to vector<2x32xf32>
    %129 = arith.negf %128 : vector<2x32xf32>
    %130 = math.exp %129 : vector<2x32xf32>
    %cst_29 = arith.constant 1.000000e+00 : f32
    %131 = vector.broadcast %cst_29 : f32 to vector<2x32xf32>
    %132 = arith.addf %131, %130 : vector<2x32xf32>
    %133 = arith.divf %131, %132 : vector<2x32xf32>
    %134 = vector.extract_strided_slice %127 {offsets = [0, 32], sizes = [2, 32], strides = [1, 1]} : vector<2x128xf32> to vector<2x32xf32>
    %135 = arith.negf %134 : vector<2x32xf32>
    %136 = math.exp %135 : vector<2x32xf32>
    %cst_30 = arith.constant 1.000000e+00 : f32
    %137 = vector.broadcast %cst_30 : f32 to vector<2x32xf32>
    %138 = arith.addf %137, %136 : vector<2x32xf32>
    %139 = arith.divf %137, %138 : vector<2x32xf32>
    %140 = vector.extract_strided_slice %127 {offsets = [0, 64], sizes = [2, 32], strides = [1, 1]} : vector<2x128xf32> to vector<2x32xf32>
    %141 = math.tanh %140 : vector<2x32xf32>
    %142 = vector.extract_strided_slice %127 {offsets = [0, 96], sizes = [2, 32], strides = [1, 1]} : vector<2x128xf32> to vector<2x32xf32>
    %143 = arith.negf %142 : vector<2x32xf32>
    %144 = math.exp %143 : vector<2x32xf32>
    %cst_31 = arith.constant 1.000000e+00 : f32
    %145 = vector.broadcast %cst_31 : f32 to vector<2x32xf32>
    %146 = arith.addf %145, %144 : vector<2x32xf32>
    %147 = arith.divf %145, %146 : vector<2x32xf32>
    %148 = arith.mulf %139, %120 : vector<2x32xf32>
    %149 = arith.mulf %133, %141 : vector<2x32xf32>
    %150 = arith.addf %148, %149 : vector<2x32xf32>
    %151 = math.tanh %150 : vector<2x32xf32>
    %152 = arith.mulf %147, %151 : vector<2x32xf32>
    %c5_i32 = arith.constant 5 : i32
    %153 = arith.index_cast %c5_i32 : i32 to index
    %c0_32 = arith.constant 0 : index
    %c0_33 = arith.constant 0 : index
    %154 = vector.load %arg0[%153, %c0_32, %c0_33] : memref<8x2x128xf32, #tpu.memory_space<vmem>>, vector<1x2x128xf32>
    %155 = vector.shape_cast %154 : vector<1x2x128xf32> to vector<2x128xf32>
    %cst_34 = arith.constant dense<0.000000e+00> : vector<2x128xf32>
    %156 = tpu.matmul %152, %0, %cst_34 {dimension_numbers = #tpu.dot_dimension_numbers<[1], [0], [0], [1], [0, 0, 1, 1], [], []>} : vector<2x32xf32>, vector<32x128xf32>, vector<2x128xf32> -> vector<2x128xf32>
    %157 = arith.addf %155, %156 : vector<2x128xf32>
    %158 = vector.extract_strided_slice %157 {offsets = [0, 0], sizes = [2, 32], strides = [1, 1]} : vector<2x128xf32> to vector<2x32xf32>
    %159 = arith.negf %158 : vector<2x32xf32>
    %160 = math.exp %159 : vector<2x32xf32>
    %cst_35 = arith.constant 1.000000e+00 : f32
    %161 = vector.broadcast %cst_35 : f32 to vector<2x32xf32>
    %162 = arith.addf %161, %160 : vector<2x32xf32>
    %163 = arith.divf %161, %162 : vector<2x32xf32>
    %164 = vector.extract_strided_slice %157 {offsets = [0, 32], sizes = [2, 32], strides = [1, 1]} : vector<2x128xf32> to vector<2x32xf32>
    %165 = arith.negf %164 : vector<2x32xf32>
    %166 = math.exp %165 : vector<2x32xf32>
    %cst_36 = arith.constant 1.000000e+00 : f32
    %167 = vector.broadcast %cst_36 : f32 to vector<2x32xf32>
    %168 = arith.addf %167, %166 : vector<2x32xf32>
    %169 = arith.divf %167, %168 : vector<2x32xf32>
    %170 = vector.extract_strided_slice %157 {offsets = [0, 64], sizes = [2, 32], strides = [1, 1]} : vector<2x128xf32> to vector<2x32xf32>
    %171 = math.tanh %170 : vector<2x32xf32>
    %172 = vector.extract_strided_slice %157 {offsets = [0, 96], sizes = [2, 32], strides = [1, 1]} : vector<2x128xf32> to vector<2x32xf32>
    %173 = arith.negf %172 : vector<2x32xf32>
    %174 = math.exp %173 : vector<2x32xf32>
    %cst_37 = arith.constant 1.000000e+00 : f32
    %175 = vector.broadcast %cst_37 : f32 to vector<2x32xf32>
    %176 = arith.addf %175, %174 : vector<2x32xf32>
    %177 = arith.divf %175, %176 : vector<2x32xf32>
    %178 = arith.mulf %169, %150 : vector<2x32xf32>
    %179 = arith.mulf %163, %171 : vector<2x32xf32>
    %180 = arith.addf %178, %179 : vector<2x32xf32>
    %181 = math.tanh %180 : vector<2x32xf32>
    %182 = arith.mulf %177, %181 : vector<2x32xf32>
    %c6_i32 = arith.constant 6 : i32
    %183 = arith.index_cast %c6_i32 : i32 to index
    %c0_38 = arith.constant 0 : index
    %c0_39 = arith.constant 0 : index
    %184 = vector.load %arg0[%183, %c0_38, %c0_39] : memref<8x2x128xf32, #tpu.memory_space<vmem>>, vector<1x2x128xf32>
    %185 = vector.shape_cast %184 : vector<1x2x128xf32> to vector<2x128xf32>
    %cst_40 = arith.constant dense<0.000000e+00> : vector<2x128xf32>
    %186 = tpu.matmul %182, %0, %cst_40 {dimension_numbers = #tpu.dot_dimension_numbers<[1], [0], [0], [1], [0, 0, 1, 1], [], []>} : vector<2x32xf32>, vector<32x128xf32>, vector<2x128xf32> -> vector<2x128xf32>
    %187 = arith.addf %185, %186 : vector<2x128xf32>
    %188 = vector.extract_strided_slice %187 {offsets = [0, 0], sizes = [2, 32], strides = [1, 1]} : vector<2x128xf32> to vector<2x32xf32>
    %189 = arith.negf %188 : vector<2x32xf32>
    %190 = math.exp %189 : vector<2x32xf32>
    %cst_41 = arith.constant 1.000000e+00 : f32
    %191 = vector.broadcast %cst_41 : f32 to vector<2x32xf32>
    %192 = arith.addf %191, %190 : vector<2x32xf32>
    %193 = arith.divf %191, %192 : vector<2x32xf32>
    %194 = vector.extract_strided_slice %187 {offsets = [0, 32], sizes = [2, 32], strides = [1, 1]} : vector<2x128xf32> to vector<2x32xf32>
    %195 = arith.negf %194 : vector<2x32xf32>
    %196 = math.exp %195 : vector<2x32xf32>
    %cst_42 = arith.constant 1.000000e+00 : f32
    %197 = vector.broadcast %cst_42 : f32 to vector<2x32xf32>
    %198 = arith.addf %197, %196 : vector<2x32xf32>
    %199 = arith.divf %197, %198 : vector<2x32xf32>
    %200 = vector.extract_strided_slice %187 {offsets = [0, 64], sizes = [2, 32], strides = [1, 1]} : vector<2x128xf32> to vector<2x32xf32>
    %201 = math.tanh %200 : vector<2x32xf32>
    %202 = vector.extract_strided_slice %187 {offsets = [0, 96], sizes = [2, 32], strides = [1, 1]} : vector<2x128xf32> to vector<2x32xf32>
    %203 = arith.negf %202 : vector<2x32xf32>
    %204 = math.exp %203 : vector<2x32xf32>
    %cst_43 = arith.constant 1.000000e+00 : f32
    %205 = vector.broadcast %cst_43 : f32 to vector<2x32xf32>
    %206 = arith.addf %205, %204 : vector<2x32xf32>
    %207 = arith.divf %205, %206 : vector<2x32xf32>
    %208 = arith.mulf %199, %180 : vector<2x32xf32>
    %209 = arith.mulf %193, %201 : vector<2x32xf32>
    %210 = arith.addf %208, %209 : vector<2x32xf32>
    %211 = math.tanh %210 : vector<2x32xf32>
    %212 = arith.mulf %207, %211 : vector<2x32xf32>
    %c7_i32 = arith.constant 7 : i32
    %213 = arith.index_cast %c7_i32 : i32 to index
    %c0_44 = arith.constant 0 : index
    %c0_45 = arith.constant 0 : index
    %214 = vector.load %arg0[%213, %c0_44, %c0_45] : memref<8x2x128xf32, #tpu.memory_space<vmem>>, vector<1x2x128xf32>
    %215 = vector.shape_cast %214 : vector<1x2x128xf32> to vector<2x128xf32>
    %cst_46 = arith.constant dense<0.000000e+00> : vector<2x128xf32>
    %216 = tpu.matmul %212, %0, %cst_46 {dimension_numbers = #tpu.dot_dimension_numbers<[1], [0], [0], [1], [0, 0, 1, 1], [], []>} : vector<2x32xf32>, vector<32x128xf32>, vector<2x128xf32> -> vector<2x128xf32>
    %217 = arith.addf %215, %216 : vector<2x128xf32>
    %218 = vector.extract_strided_slice %217 {offsets = [0, 0], sizes = [2, 32], strides = [1, 1]} : vector<2x128xf32> to vector<2x32xf32>
    %219 = arith.negf %218 : vector<2x32xf32>
    %220 = math.exp %219 : vector<2x32xf32>
    %cst_47 = arith.constant 1.000000e+00 : f32
    %221 = vector.broadcast %cst_47 : f32 to vector<2x32xf32>
    %222 = arith.addf %221, %220 : vector<2x32xf32>
    %223 = arith.divf %221, %222 : vector<2x32xf32>
    %224 = vector.extract_strided_slice %217 {offsets = [0, 32], sizes = [2, 32], strides = [1, 1]} : vector<2x128xf32> to vector<2x32xf32>
    %225 = arith.negf %224 : vector<2x32xf32>
    %226 = math.exp %225 : vector<2x32xf32>
    %cst_48 = arith.constant 1.000000e+00 : f32
    %227 = vector.broadcast %cst_48 : f32 to vector<2x32xf32>
    %228 = arith.addf %227, %226 : vector<2x32xf32>
    %229 = arith.divf %227, %228 : vector<2x32xf32>
    %230 = vector.extract_strided_slice %217 {offsets = [0, 64], sizes = [2, 32], strides = [1, 1]} : vector<2x128xf32> to vector<2x32xf32>
    %231 = math.tanh %230 : vector<2x32xf32>
    %232 = vector.extract_strided_slice %217 {offsets = [0, 96], sizes = [2, 32], strides = [1, 1]} : vector<2x128xf32> to vector<2x32xf32>
    %233 = arith.negf %232 : vector<2x32xf32>
    %234 = math.exp %233 : vector<2x32xf32>
    %cst_49 = arith.constant 1.000000e+00 : f32
    %235 = vector.broadcast %cst_49 : f32 to vector<2x32xf32>
    %236 = arith.addf %235, %234 : vector<2x32xf32>
    %237 = arith.divf %235, %236 : vector<2x32xf32>
    %238 = arith.mulf %229, %210 : vector<2x32xf32>
    %239 = arith.mulf %223, %231 : vector<2x32xf32>
    %240 = arith.addf %238, %239 : vector<2x32xf32>
    %241 = math.tanh %240 : vector<2x32xf32>
    %242 = arith.mulf %237, %241 : vector<2x32xf32>
    %c8_i32 = arith.constant 8 : i32
    %c0_50 = arith.constant 0 : index
    %c0_51 = arith.constant 0 : index
    %243 = vector.load %arg2[%c0_50, %c0_51] : memref<32x1xf32, #tpu.memory_space<vmem>>, vector<32x1xf32>
    %cst_52 = arith.constant dense<0.000000e+00> : vector<2x1xf32>
    %244 = tpu.matmul %242, %243, %cst_52 {dimension_numbers = #tpu.dot_dimension_numbers<[1], [0], [0], [1], [0, 0, 1, 1], [], []>} : vector<2x32xf32>, vector<32x1xf32>, vector<2x1xf32> -> vector<2x1xf32>
    %c0_53 = arith.constant 0 : index
    %c0_54 = arith.constant 0 : index
    %245 = memref.load %arg3[%c0_53, %c0_54] : memref<1x1xf32, #tpu.memory_space<smem>>
    %246 = vector.broadcast %245 : f32 to vector<2x1xf32>
    %247 = arith.addf %244, %246 : vector<2x1xf32>
    %c0_55 = arith.constant 0 : index
    %c0_56 = arith.constant 0 : index
    %248 = vector.load %arg4[%c0_55, %c0_56] : memref<2x1xf32, #tpu.memory_space<vmem>>, vector<2x1xf32>
    tpu.vector_store %arg4[%c0_55, %c0_56], %247 {strides = array<i32>} : memref<2x1xf32, #tpu.memory_space<vmem>>, vector<2x1xf32>,
    return
  }
}

</mosaic_0001>

<llo_original>
// kernel: tpu_custom_call.1
$region0: #{tpu_custom_call.1}
  #allocation0 [shape = 'u32[]', space=smem, size = 0x4, offset = 0x4, fixed_abs, tag = 'smem constant byte address 0x4 - core index']
  #allocation1 [shape = 'u32[144,128]{1,0:T(1,128)}', space=vmem, size = 0x12000, scoped, tag = 'internal scratch']
  #allocation2 [shape = 'f32[1,1]{1,0:T(1,128)S(6)}', space=smem, size = 0x200, scoped, tag = 'scoped memory for tpu_custom_call.1']
  %s0 = inlined_call_operand.hbm [shape: f32[8,2,128], index: 0, kind: input, shape index: {}]
  %s1 = inlined_call_operand.vmem [shape: f32[32,128], index: 1, kind: input, shape index: {}]
  %s2 = inlined_call_operand.vmem [shape: f32[32,1], index: 2, kind: input, shape index: {}]
  %s3 = inlined_call_operand.<no memory space> [shape: f32[1,1], index: 3, kind: input, shape index: {}]
  %s4 = inlined_call_operand.vmem [shape: f32[2,1], index: 4, kind: output, shape index: {}]
  %s5 = sld [smem:[#allocation0]]
  $region30: #{tpu_custom_call.1} parent=0
    _
  %s7 = ssub.s32 1, %s5
  %s8 = scalar_select 0, %s7, %s5
  %9 = sst [smem:[#allocation2]] %s3
  $region1: #{tpu_custom_call.1} parent=0
    #allocation3 [shape = 'u8[8192]{0}', space=vmem, size = 0x2000, scoped, tag = 'input window, operand 0, single buffered']
    #allocation4 [shape = 's32[1]{0}', space=sflag, size = 0x4, scoped, tag = 'scoped memory for tpu_custom_call.1']
    %10 = vsyncpa [#allocation4], 0
    // Predicated region
    $region2: #{tpu_custom_call.1} parent=1 // pred_check
      _
    $region3: #{tpu_custom_call.1} parent=1 // pred_check_branch
      %12 = sbr.rel (0) target = $region5
    $region4: #{tpu_custom_call.1} parent=1 // pred_region
      %s14 = ssub.s32 256, 256
      %15 = vsyncadd [#allocation4], %s14
      %s16 = sshll.u32 [#allocation3], 4
      %s17 = int_to_ptr.vmem [resolvable:$true] %s16
      %22 = dma.hbm_to_vmem [thread:$0]  %s0, 256, %s17, [#allocation4], 32, 32, 2
    $region5: #{tpu_custom_call.1} parent=1 // pred_fallthru
      _
    // Predicated region
    $region6: #{tpu_custom_call.1} parent=1 // pred_check
      _
    $region7: #{tpu_custom_call.1} parent=1 // pred_check_branch
      %24 = sbr.rel (0) target = $region9
    $region8: #{tpu_custom_call.1} parent=1 // pred_region
      _
    $region9: #{tpu_custom_call.1} parent=1 // pred_fallthru
      _
    // Predicated region
    $region10: #{tpu_custom_call.1} parent=1 // pred_check
      _
    $region11: #{tpu_custom_call.1} parent=1 // pred_check_branch
      %26 = sbr.rel (0) target = $region13
    $region12: #{tpu_custom_call.1} parent=1 // pred_region
      _
    $region13: #{tpu_custom_call.1} parent=1 // pred_fallthru
      _
    // Predicated region
    $region14: #{tpu_custom_call.1} parent=1 // pred_check
      _
    $region15: #{tpu_custom_call.1} parent=1 // pred_check_branch
      %28 = sbr.rel (0) target = $region17
    $region16: #{tpu_custom_call.1} parent=1 // pred_region
      _
    $region17: #{tpu_custom_call.1} parent=1 // pred_fallthru
      _
    // Predicated region
    $region18: #{tpu_custom_call.1} parent=1 // pred_check
      _
    $region19: #{tpu_custom_call.1} parent=1 // pred_check_branch
      %30 = sbr.rel (0) target = $region21
    $region20: #{tpu_custom_call.1} parent=1 // pred_region
      %31 = dma.done [#allocation4], 256
    $region21: #{tpu_custom_call.1} parent=1 // pred_fallthru
      _
    %v32 = vld [vmem:[%s1] sm:$0xff]
    %v33 = vld [vmem:[%s1 + $0x8] sm:$0xff]
    %v34 = vld [vmem:[%s1 + $0x10] sm:$0xff]
    %v35 = vld [vmem:[%s1 + $0x18] sm:$0xff]
    %v36 = vld [vmem:[#allocation3] sm:$0x3]
    %vm37 = vcmask 261120
    %v39 = vsel %vm37, 0.0, 0
    %41 = vmatprep.subr.mxu0 0.0
    %42 = vmatpush1.msra.mxu0 %v32
    %43 = vmatprep.subr.mxu0 0.0
    %44 = vmatpush1.msra.mxu0 %v33
    %45 = vmatprep.subr.mxu0 0.0
    %46 = vmatpush1.msra.mxu0 %v34
    %47 = vmatprep.subr.mxu0 0.0
    %48 = vmatpush1.msra.mxu0 %v35
    %49 = vmatprep.subr.mxu0 0.0
    %50 = vmatpush1.msra.mxu0 0.0
    %51 = vmatprep.subr.mxu0 0.0
    %52 = vmatpush1.msra.mxu0 0.0
    %53 = vmatprep.subr.mxu0 0.0
    %54 = vmatpush1.msra.mxu0 0.0
    %55 = vmatprep.subr.mxu0 0.0
    %56 = vmatpush1.msra.mxu0 0.0
    %57 = vmatprep.subr.mxu0 0.0
    %58 = vmatpush1.msra.mxu0 0.0
    %59 = vmatprep.subr.mxu0 0.0
    %60 = vmatpush1.msra.mxu0 0.0
    %61 = vmatprep.subr.mxu0 0.0
    %62 = vmatpush1.msra.mxu0 0.0
    %63 = vmatprep.subr.mxu0 0.0
    %64 = vmatpush1.msra.mxu0 0.0
    %65 = vmatprep.subr.mxu0 0.0
    %66 = vmatpush1.msra.mxu0 0.0
    %67 = vmatprep.subr.mxu0 0.0
    %68 = vmatpush1.msra.mxu0 0.0
    %69 = vmatprep.subr.mxu0 0.0
    %70 = vmatpush1.msra.mxu0 0.0
    %71 = vmatprep.subr.mxu0 0.0
    %72 = vmatpush1.msra.mxu0 0.0
    %73 = vmatprep.subr.mxu0 0.0
    %74 = vmatpush1.msra.mxu0 0.0
    %75 = vmatprep.subr.mxu0 0.0
    %76 = vmatpush1.msra.mxu0 0.0
    %77 = vmatprep.subr.mxu0 0.0
    %78 = vmatpush1.msra.mxu0 0.0
    %79 = vmatprep.subr.mxu0 0.0
    %80 = vmatpush1.msra.mxu0 0.0
    %81 = vmatprep.subr.mxu0 0.0
    %82 = vmatpush1.msra.mxu0 0.0
    %83 = vmatprep.subr.mxu0 0.0
    %84 = vmatpush1.msra.mxu0 0.0
    %85 = vmatprep.subr.mxu0 0.0
    %86 = vmatpush1.msra.mxu0 0.0
    %87 = vmatprep.subr.mxu0 0.0
    %88 = vmatpush1.msra.mxu0 0.0
    %89 = vmatprep.subr.mxu0 0.0
    %90 = vmatpush1.msra.mxu0 0.0
    %91 = vmatprep.subr.mxu0 0.0
    %92 = vmatpush1.msra.mxu0 0.0
    %93 = vmatprep.subr.mxu0 0.0
    %94 = vmatpush1.msra.mxu0 0.0
    %95 = vmatprep.subr.mxu0 0.0
    %96 = vmatpush1.msra.mxu0 0.0
    %97 = vmatprep.subr.mxu0 0.0
    %98 = vmatpush1.msra.mxu0 0.0
    %99 = vmatprep.subr.mxu0 0.0
    %100 = vmatpush1.msra.mxu0 0.0
    %101 = vmatprep.subr.mxu0 0.0
    %102 = vmatpush1.msra.mxu0 0.0
    %103 = vmatprep.subr.mxu0 0.0
    %104 = vmatpush1.msra.mxu0 0.0
    %105 = vmatprep.mubr.f32.mxu0 0.0
    %106 = vmatmul.mubr.f32.gmra.mrb[0].mxu0 %v39
    %v107 = vpop.f32.mrb[0].mxu0
    %v108 = vadd.f32 0.0, %v107
    %v109 = vpop.f32.mrb[0].mxu0
    %110 = vdwg.mxu0
    %v111 = vadd.f32 %v36, %v108
    %v112 = vxor.u32 %v111, 2147483648
    %v113 = vmul.f32 %v112, 1.442695
    %v114 = vpow.pop %v113
    %v115 = vadd.f32 %v114, 1.0
    %v116 = vrcp.pop %v115
    %v117 = vmul.f32 1.0, %v116
    %v118 = vtanh.pop %v111
    %v119 = vmul.f32 %v117, 0.0
    %121 = vrot.lane.b32.xlu0 %v118, 64
    %v122 = vpop.permute.xlu0 %121
    %v124 = vmul.f32 %v117, %v122
    %126 = vrot.lane.b32.xlu0 %v124, 32
    %v127 = vpop.permute.xlu0 %126
    %v129 = vadd.f32 %v119, %v127
    %v130 = vtanh.pop %v129
    %132 = vrot.lane.b32.xlu0 %v130, 64
    %v133 = vpop.permute.xlu0 %132
    %v135 = vmul.f32 %v117, %v133
    %s136 = scalar_lea.vmem [#allocation3], 2
    %v137 = vld [vmem:[%s136] sm:$0x3]
    %139 = vrot.lane.b32.xlu0 %v135, 32
    %v140 = vpop.permute.xlu0 %139
    %v141 = vsel %vm37, %v140, 0
    %143 = vmatprep.subr.mxu0 0.0
    %144 = vmatpush1.msra.mxu0 %v32
    %145 = vmatprep.subr.mxu0 0.0
    %146 = vmatpush1.msra.mxu0 %v33
    %147 = vmatprep.subr.mxu0 0.0
    %148 = vmatpush1.msra.mxu0 %v34
    %149 = vmatprep.subr.mxu0 0.0
    %150 = vmatpush1.msra.mxu0 %v35
    %151 = vmatprep.subr.mxu0 0.0
    %152 = vmatpush1.msra.mxu0 0.0
    %153 = vmatprep.subr.mxu0 0.0
    %154 = vmatpush1.msra.mxu0 0.0
    %155 = vmatprep.subr.mxu0 0.0
    %156 = vmatpush1.msra.mxu0 0.0
    %157 = vmatprep.subr.mxu0 0.0
    %158 = vmatpush1.msra.mxu0 0.0
    %159 = vmatprep.subr.mxu0 0.0
    %160 = vmatpush1.msra.mxu0 0.0
    %161 = vmatprep.subr.mxu0 0.0
    %162 = vmatpush1.msra.mxu0 0.0
    %163 = vmatprep.subr.mxu0 0.0
    %164 = vmatpush1.msra.mxu0 0.0
    %165 = vmatprep.subr.mxu0 0.0
    %166 = vmatpush1.msra.mxu0 0.0
    %167 = vmatprep.subr.mxu0 0.0
    %168 = vmatpush1.msra.mxu0 0.0
    %169 = vmatprep.subr.mxu0 0.0
    %170 = vmatpush1.msra.mxu0 0.0
    %171 = vmatprep.subr.mxu0 0.0
    %172 = vmatpush1.msra.mxu0 0.0
    %173 = vmatprep.subr.mxu0 0.0
    %174 = vmatpush1.msra.mxu0 0.0
    %175 = vmatprep.subr.mxu0 0.0
    %176 = vmatpush1.msra.mxu0 0.0
    %177 = vmatprep.subr.mxu0 0.0
    %178 = vmatpush1.msra.mxu0 0.0
    %179 = vmatprep.subr.mxu0 0.0
    %180 = vmatpush1.msra.mxu0 0.0
    %181 = vmatprep.subr.mxu0 0.0
    %182 = vmatpush1.msra.mxu0 0.0
    %183 = vmatprep.subr.mxu0 0.0
    %184 = vmatpush1.msra.mxu0 0.0
    %185 = vmatprep.subr.mxu0 0.0
    %186 = vmatpush1.msra.mxu0 0.0
    %187 = vmatprep.subr.mxu0 0.0
    %188 = vmatpush1.msra.mxu0 0.0
    %189 = vmatprep.subr.mxu0 0.0
    %190 = vmatpush1.msra.mxu0 0.0
    %191 = vmatprep.subr.mxu0 0.0
    %192 = vmatpush1.msra.mxu0 0.0
    %193 = vmatprep.subr.mxu0 0.0
    %194 = vmatpush1.msra.mxu0 0.0
    %195 = vmatprep.subr.mxu0 0.0
    %196 = vmatpush1.msra.mxu0 0.0
    %197 = vmatprep.subr.mxu0 0.0
    %198 = vmatpush1.msra.mxu0 0.0
    %199 = vmatprep.subr.mxu0 0.0
    %200 = vmatpush1.msra.mxu0 0.0
    %201 = vmatprep.subr.mxu0 0.0
    %202 = vmatpush1.msra.mxu0 0.0
    %203 = vmatprep.subr.mxu0 0.0
    %204 = vmatpush1.msra.mxu0 0.0
    %205 = vmatprep.subr.mxu0 0.0
    %206 = vmatpush1.msra.mxu0 0.0
    %207 = vmatprep.mubr.f32.mxu0 0.0
    %208 = vmatmul.mubr.f32.gmra.mrb[0].mxu0 %v141
    %v209 = vpop.f32.mrb[0].mxu0
    %v210 = vadd.f32 0.0, %v209
    %v211 = vpop.f32.mrb[0].mxu0
    %212 = vdwg.mxu0
    %v213 = vadd.f32 %v137, %v210
    %v214 = vxor.u32 %v213, 2147483648
    %v215 = vmul.f32 %v214, 1.442695
    %v216 = vpow.pop %v215
    %v217 = vadd.f32 %v216, 1.0
    %v218 = vrcp.pop %v217
    %v219 = vmul.f32 1.0, %v218
    %v220 = vtanh.pop %v213
    %v221 = vmul.f32 %v219, %v129
    %223 = vrot.lane.b32.xlu0 %v220, 64
    %v224 = vpop.permute.xlu0 %223
    %v226 = vmul.f32 %v219, %v224
    %228 = vrot.lane.b32.xlu0 %v226, 32
    %v229 = vpop.permute.xlu0 %228
    %v231 = vadd.f32 %v221, %v229
    %v232 = vtanh.pop %v231
    %234 = vrot.lane.b32.xlu0 %v232, 64
    %v235 = vpop.permute.xlu0 %234
    %v237 = vmul.f32 %v219, %v235
    %s238 = scalar_lea.vmem [#allocation3], 4
    %v239 = vld [vmem:[%s238] sm:$0x3]
    %241 = vrot.lane.b32.xlu0 %v237, 32
    %v242 = vpop.permute.xlu0 %241
    %v243 = vsel %vm37, %v242, 0
    %245 = vmatprep.subr.mxu0 0.0
    %246 = vmatpush1.msra.mxu0 %v32
    %247 = vmatprep.subr.mxu0 0.0
    %248 = vmatpush1.msra.mxu0 %v33
    %249 = vmatprep.subr.mxu0 0.0
    %250 = vmatpush1.msra.mxu0 %v34
    %251 = vmatprep.subr.mxu0 0.0
    %252 = vmatpush1.msra.mxu0 %v35
    %253 = vmatprep.subr.mxu0 0.0
    %254 = vmatpush1.msra.mxu0 0.0
    %255 = vmatprep.subr.mxu0 0.0
    %256 = vmatpush1.msra.mxu0 0.0
    %257 = vmatprep.subr.mxu0 0.0
    %258 = vmatpush1.msra.mxu0 0.0
    %259 = vmatprep.subr.mxu0 0.0
    %260 = vmatpush1.msra.mxu0 0.0
    %261 = vmatprep.subr.mxu0 0.0
    %262 = vmatpush1.msra.mxu0 0.0
    %263 = vmatprep.subr.mxu0 0.0
    %264 = vmatpush1.msra.mxu0 0.0
    %265 = vmatprep.subr.mxu0 0.0
    %266 = vmatpush1.msra.mxu0 0.0
    %267 = vmatprep.subr.mxu0 0.0
    %268 = vmatpush1.msra.mxu0 0.0
    %269 = vmatprep.subr.mxu0 0.0
    %270 = vmatpush1.msra.mxu0 0.0
    %271 = vmatprep.subr.mxu0 0.0
    %272 = vmatpush1.msra.mxu0 0.0
    %273 = vmatprep.subr.mxu0 0.0
    %274 = vmatpush1.msra.mxu0 0.0
    %275 = vmatprep.subr.mxu0 0.0
    %276 = vmatpush1.msra.mxu0 0.0
    %277 = vmatprep.subr.mxu0 0.0
    %278 = vmatpush1.msra.mxu0 0.0
    %279 = vmatprep.subr.mxu0 0.0
    %280 = vmatpush1.msra.mxu0 0.0
    %281 = vmatprep.subr.mxu0 0.0
    %282 = vmatpush1.msra.mxu0 0.0
    %283 = vmatprep.subr.mxu0 0.0
    %284 = vmatpush1.msra.mxu0 0.0
    %285 = vmatprep.subr.mxu0 0.0
    %286 = vmatpush1.msra.mxu0 0.0
    %287 = vmatprep.subr.mxu0 0.0
    %288 = vmatpush1.msra.mxu0 0.0
    %289 = vmatprep.subr.mxu0 0.0
    %290 = vmatpush1.msra.mxu0 0.0
    %291 = vmatprep.subr.mxu0 0.0
    %292 = vmatpush1.msra.mxu0 0.0
    %293 = vmatprep.subr.mxu0 0.0
    %294 = vmatpush1.msra.mxu0 0.0
    %295 = vmatprep.subr.mxu0 0.0
    %296 = vmatpush1.msra.mxu0 0.0
    %297 = vmatprep.subr.mxu0 0.0
    %298 = vmatpush1.msra.mxu0 0.0
    %299 = vmatprep.subr.mxu0 0.0
    %300 = vmatpush1.msra.mxu0 0.0
    %301 = vmatprep.subr.mxu0 0.0
    %302 = vmatpush1.msra.mxu0 0.0
    %303 = vmatprep.subr.mxu0 0.0
    %304 = vmatpush1.msra.mxu0 0.0
    %305 = vmatprep.subr.mxu0 0.0
    %306 = vmatpush1.msra.mxu0 0.0
    %307 = vmatprep.subr.mxu0 0.0
    %308 = vmatpush1.msra.mxu0 0.0
    %309 = vmatprep.mubr.f32.mxu0 0.0
    %310 = vmatmul.mubr.f32.gmra.mrb[0].mxu0 %v243
    %v311 = vpop.f32.mrb[0].mxu0
    %v312 = vadd.f32 0.0, %v311
    %v313 = vpop.f32.mrb[0].mxu0
    %314 = vdwg.mxu0
    %v315 = vadd.f32 %v239, %v312
    %v316 = vxor.u32 %v315, 2147483648
    %v317 = vmul.f32 %v316, 1.442695
    %v318 = vpow.pop %v317
    %v319 = vadd.f32 %v318, 1.0
    %v320 = vrcp.pop %v319
    %v321 = vmul.f32 1.0, %v320
    %v322 = vtanh.pop %v315
    %v323 = vmul.f32 %v321, %v231
    %325 = vrot.lane.b32.xlu0 %v322, 64
    %v326 = vpop.permute.xlu0 %325
    %v328 = vmul.f32 %v321, %v326
    %330 = vrot.lane.b32.xlu0 %v328, 32
    %v331 = vpop.permute.xlu0 %330
    %v333 = vadd.f32 %v323, %v331
    %v334 = vtanh.pop %v333
    %336 = vrot.lane.b32.xlu0 %v334, 64
    %v337 = vpop.permute.xlu0 %336
    %v339 = vmul.f32 %v321, %v337
    %s340 = scalar_lea.vmem [#allocation3], 6
    %v341 = vld [vmem:[%s340] sm:$0x3]
    %343 = vrot.lane.b32.xlu0 %v339, 32
    %v344 = vpop.permute.xlu0 %343
    %v345 = vsel %vm37, %v344, 0
    %347 = vmatprep.subr.mxu0 0.0
    %348 = vmatpush1.msra.mxu0 %v32
    %349 = vmatprep.subr.mxu0 0.0
    %350 = vmatpush1.msra.mxu0 %v33
    %351 = vmatprep.subr.mxu0 0.0
    %352 = vmatpush1.msra.mxu0 %v34
    %353 = vmatprep.subr.mxu0 0.0
    %354 = vmatpush1.msra.mxu0 %v35
    %355 = vmatprep.subr.mxu0 0.0
    %356 = vmatpush1.msra.mxu0 0.0
    %357 = vmatprep.subr.mxu0 0.0
    %358 = vmatpush1.msra.mxu0 0.0
    %359 = vmatprep.subr.mxu0 0.0
    %360 = vmatpush1.msra.mxu0 0.0
    %361 = vmatprep.subr.mxu0 0.0
    %362 = vmatpush1.msra.mxu0 0.0
    %363 = vmatprep.subr.mxu0 0.0
    %364 = vmatpush1.msra.mxu0 0.0
    %365 = vmatprep.subr.mxu0 0.0
    %366 = vmatpush1.msra.mxu0 0.0
    %367 = vmatprep.subr.mxu0 0.0
    %368 = vmatpush1.msra.mxu0 0.0
    %369 = vmatprep.subr.mxu0 0.0
    %370 = vmatpush1.msra.mxu0 0.0
    %371 = vmatprep.subr.mxu0 0.0
    %372 = vmatpush1.msra.mxu0 0.0
    %373 = vmatprep.subr.mxu0 0.0
    %374 = vmatpush1.msra.mxu0 0.0
    %375 = vmatprep.subr.mxu0 0.0
    %376 = vmatpush1.msra.mxu0 0.0
    %377 = vmatprep.subr.mxu0 0.0
    %378 = vmatpush1.msra.mxu0 0.0
    %379 = vmatprep.subr.mxu0 0.0
    %380 = vmatpush1.msra.mxu0 0.0
    %381 = vmatprep.subr.mxu0 0.0
    %382 = vmatpush1.msra.mxu0 0.0
    %383 = vmatprep.subr.mxu0 0.0
    %384 = vmatpush1.msra.mxu0 0.0
    %385 = vmatprep.subr.mxu0 0.0
    %386 = vmatpush1.msra.mxu0 0.0
    %387 = vmatprep.subr.mxu0 0.0
    %388 = vmatpush1.msra.mxu0 0.0
    %389 = vmatprep.subr.mxu0 0.0
    %390 = vmatpush1.msra.mxu0 0.0
    %391 = vmatprep.subr.mxu0 0.0
    %392 = vmatpush1.msra.mxu0 0.0
    %393 = vmatprep.subr.mxu0 0.0
    %394 = vmatpush1.msra.mxu0 0.0
    %395 = vmatprep.subr.mxu0 0.0
    %396 = vmatpush1.msra.mxu0 0.0
    %397 = vmatprep.subr.mxu0 0.0
    %398 = vmatpush1.msra.mxu0 0.0
    %399 = vmatprep.subr.mxu0 0.0
    %400 = vmatpush1.msra.mxu0 0.0
    %401 = vmatprep.subr.mxu0 0.0
    %402 = vmatpush1.msra.mxu0 0.0
    %403 = vmatprep.subr.mxu0 0.0
    %404 = vmatpush1.msra.mxu0 0.0
    %405 = vmatprep.subr.mxu0 0.0
    %406 = vmatpush1.msra.mxu0 0.0
    %407 = vmatprep.subr.mxu0 0.0
    %408 = vmatpush1.msra.mxu0 0.0
    %409 = vmatprep.subr.mxu0 0.0
    %410 = vmatpush1.msra.mxu0 0.0
    %411 = vmatprep.mubr.f32.mxu0 0.0
    %412 = vmatmul.mubr.f32.gmra.mrb[0].mxu0 %v345
    %v413 = vpop.f32.mrb[0].mxu0
    %v414 = vadd.f32 0.0, %v413
    %v415 = vpop.f32.mrb[0].mxu0
    %416 = vdwg.mxu0
    %v417 = vadd.f32 %v341, %v414
    %v418 = vxor.u32 %v417, 2147483648
    %v419 = vmul.f32 %v418, 1.442695
    %v420 = vpow.pop %v419
    %v421 = vadd.f32 %v420, 1.0
    %v422 = vrcp.pop %v421
    %v423 = vmul.f32 1.0, %v422
    %v424 = vtanh.pop %v417
    %v425 = vmul.f32 %v423, %v333
    %427 = vrot.lane.b32.xlu0 %v424, 64
    %v428 = vpop.permute.xlu0 %427
    %v430 = vmul.f32 %v423, %v428
    %432 = vrot.lane.b32.xlu0 %v430, 32
    %v433 = vpop.permute.xlu0 %432
    %v435 = vadd.f32 %v425, %v433
    %v436 = vtanh.pop %v435
    %438 = vrot.lane.b32.xlu0 %v436, 64
    %v439 = vpop.permute.xlu0 %438
    %v441 = vmul.f32 %v423, %v439
    %s442 = scalar_lea.vmem [#allocation3], 8
    %v443 = vld [vmem:[%s442] sm:$0x3]
    %445 = vrot.lane.b32.xlu0 %v441, 32
    %v446 = vpop.permute.xlu0 %445
    %v447 = vsel %vm37, %v446, 0
    %449 = vmatprep.subr.mxu0 0.0
    %450 = vmatpush1.msra.mxu0 %v32
    %451 = vmatprep.subr.mxu0 0.0
    %452 = vmatpush1.msra.mxu0 %v33
    %453 = vmatprep.subr.mxu0 0.0
    %454 = vmatpush1.msra.mxu0 %v34
    %455 = vmatprep.subr.mxu0 0.0
    %456 = vmatpush1.msra.mxu0 %v35
    %457 = vmatprep.subr.mxu0 0.0
    %458 = vmatpush1.msra.mxu0 0.0
    %459 = vmatprep.subr.mxu0 0.0
    %460 = vmatpush1.msra.mxu0 0.0
    %461 = vmatprep.subr.mxu0 0.0
    %462 = vmatpush1.msra.mxu0 0.0
    %463 = vmatprep.subr.mxu0 0.0
    %464 = vmatpush1.msra.mxu0 0.0
    %465 = vmatprep.subr.mxu0 0.0
    %466 = vmatpush1.msra.mxu0 0.0
    %467 = vmatprep.subr.mxu0 0.0
    %468 = vmatpush1.msra.mxu0 0.0
    %469 = vmatprep.subr.mxu0 0.0
    %470 = vmatpush1.msra.mxu0 0.0
    %471 = vmatprep.subr.mxu0 0.0
    %472 = vmatpush1.msra.mxu0 0.0
    %473 = vmatprep.subr.mxu0 0.0
    %474 = vmatpush1.msra.mxu0 0.0
    %475 = vmatprep.subr.mxu0 0.0
    %476 = vmatpush1.msra.mxu0 0.0
    %477 = vmatprep.subr.mxu0 0.0
    %478 = vmatpush1.msra.mxu0 0.0
    %479 = vmatprep.subr.mxu0 0.0
    %480 = vmatpush1.msra.mxu0 0.0
    %481 = vmatprep.subr.mxu0 0.0
    %482 = vmatpush1.msra.mxu0 0.0
    %483 = vmatprep.subr.mxu0 0.0
    %484 = vmatpush1.msra.mxu0 0.0
    %485 = vmatprep.subr.mxu0 0.0
    %486 = vmatpush1.msra.mxu0 0.0
    %487 = vmatprep.subr.mxu0 0.0
    %488 = vmatpush1.msra.mxu0 0.0
    %489 = vmatprep.subr.mxu0 0.0
    %490 = vmatpush1.msra.mxu0 0.0
    %491 = vmatprep.subr.mxu0 0.0
    %492 = vmatpush1.msra.mxu0 0.0
    %493 = vmatprep.subr.mxu0 0.0
    %494 = vmatpush1.msra.mxu0 0.0
    %495 = vmatprep.subr.mxu0 0.0
    %496 = vmatpush1.msra.mxu0 0.0
    %497 = vmatprep.subr.mxu0 0.0
    %498 = vmatpush1.msra.mxu0 0.0
    %499 = vmatprep.subr.mxu0 0.0
    %500 = vmatpush1.msra.mxu0 0.0
    %501 = vmatprep.subr.mxu0 0.0
    %502 = vmatpush1.msra.mxu0 0.0
    %503 = vmatprep.subr.mxu0 0.0
    %504 = vmatpush1.msra.mxu0 0.0
    %505 = vmatprep.subr.mxu0 0.0
    %506 = vmatpush1.msra.mxu0 0.0
    %507 = vmatprep.subr.mxu0 0.0
    %508 = vmatpush1.msra.mxu0 0.0
    %509 = vmatprep.subr.mxu0 0.0
    %510 = vmatpush1.msra.mxu0 0.0
    %511 = vmatprep.subr.mxu0 0.0
    %512 = vmatpush1.msra.mxu0 0.0
    %513 = vmatprep.mubr.f32.mxu0 0.0
    %514 = vmatmul.mubr.f32.gmra.mrb[0].mxu0 %v447
    %v515 = vpop.f32.mrb[0].mxu0
    %v516 = vadd.f32 0.0, %v515
    %v517 = vpop.f32.mrb[0].mxu0
    %518 = vdwg.mxu0
    %v519 = vadd.f32 %v443, %v516
    %v520 = vxor.u32 %v519, 2147483648
    %v521 = vmul.f32 %v520, 1.442695
    %v522 = vpow.pop %v521
    %v523 = vadd.f32 %v522, 1.0
    %v524 = vrcp.pop %v523
    %v525 = vmul.f32 1.0, %v524
    %v526 = vtanh.pop %v519
    %v527 = vmul.f32 %v525, %v435
    %529 = vrot.lane.b32.xlu0 %v526, 64
    %v530 = vpop.permute.xlu0 %529
    %v532 = vmul.f32 %v525, %v530
    %534 = vrot.lane.b32.xlu0 %v532, 32
    %v535 = vpop.permute.xlu0 %534
    %v537 = vadd.f32 %v527, %v535
    %v538 = vtanh.pop %v537
    %540 = vrot.lane.b32.xlu0 %v538, 64
    %v541 = vpop.permute.xlu0 %540
    %v543 = vmul.f32 %v525, %v541
    %s544 = scalar_lea.vmem [#allocation3], 10
    %v545 = vld [vmem:[%s544] sm:$0x3]
    %547 = vrot.lane.b32.xlu0 %v543, 32
    %v548 = vpop.permute.xlu0 %547
    %v549 = vsel %vm37, %v548, 0
    %551 = vmatprep.subr.mxu0 0.0
    %552 = vmatpush1.msra.mxu0 %v32
    %553 = vmatprep.subr.mxu0 0.0
    %554 = vmatpush1.msra.mxu0 %v33
    %555 = vmatprep.subr.mxu0 0.0
    %556 = vmatpush1.msra.mxu0 %v34
    %557 = vmatprep.subr.mxu0 0.0
    %558 = vmatpush1.msra.mxu0 %v35
    %559 = vmatprep.subr.mxu0 0.0
    %560 = vmatpush1.msra.mxu0 0.0
    %561 = vmatprep.subr.mxu0 0.0
    %562 = vmatpush1.msra.mxu0 0.0
    %563 = vmatprep.subr.mxu0 0.0
    %564 = vmatpush1.msra.mxu0 0.0
    %565 = vmatprep.subr.mxu0 0.0
    %566 = vmatpush1.msra.mxu0 0.0
    %567 = vmatprep.subr.mxu0 0.0
    %568 = vmatpush1.msra.mxu0 0.0
    %569 = vmatprep.subr.mxu0 0.0
    %570 = vmatpush1.msra.mxu0 0.0
    %571 = vmatprep.subr.mxu0 0.0
    %572 = vmatpush1.msra.mxu0 0.0
    %573 = vmatprep.subr.mxu0 0.0
    %574 = vmatpush1.msra.mxu0 0.0
    %575 = vmatprep.subr.mxu0 0.0
    %576 = vmatpush1.msra.mxu0 0.0
    %577 = vmatprep.subr.mxu0 0.0
    %578 = vmatpush1.msra.mxu0 0.0
    %579 = vmatprep.subr.mxu0 0.0
    %580 = vmatpush1.msra.mxu0 0.0
    %581 = vmatprep.subr.mxu0 0.0
    %582 = vmatpush1.msra.mxu0 0.0
    %583 = vmatprep.subr.mxu0 0.0
    %584 = vmatpush1.msra.mxu0 0.0
    %585 = vmatprep.subr.mxu0 0.0
    %586 = vmatpush1.msra.mxu0 0.0
    %587 = vmatprep.subr.mxu0 0.0
    %588 = vmatpush1.msra.mxu0 0.0
    %589 = vmatprep.subr.mxu0 0.0
    %590 = vmatpush1.msra.mxu0 0.0
    %591 = vmatprep.subr.mxu0 0.0
    %592 = vmatpush1.msra.mxu0 0.0
    %593 = vmatprep.subr.mxu0 0.0
    %594 = vmatpush1.msra.mxu0 0.0
    %595 = vmatprep.subr.mxu0 0.0
    %596 = vmatpush1.msra.mxu0 0.0
    %597 = vmatprep.subr.mxu0 0.0
    %598 = vmatpush1.msra.mxu0 0.0
    %599 = vmatprep.subr.mxu0 0.0
    %600 = vmatpush1.msra.mxu0 0.0
    %601 = vmatprep.subr.mxu0 0.0
    %602 = vmatpush1.msra.mxu0 0.0
    %603 = vmatprep.subr.mxu0 0.0
    %604 = vmatpush1.msra.mxu0 0.0
    %605 = vmatprep.subr.mxu0 0.0
    %606 = vmatpush1.msra.mxu0 0.0
    %607 = vmatprep.subr.mxu0 0.0
    %608 = vmatpush1.msra.mxu0 0.0
    %609 = vmatprep.subr.mxu0 0.0
    %610 = vmatpush1.msra.mxu0 0.0
    %611 = vmatprep.subr.mxu0 0.0
    %612 = vmatpush1.msra.mxu0 0.0
    %613 = vmatprep.subr.mxu0 0.0
    %614 = vmatpush1.msra.mxu0 0.0
    %615 = vmatprep.mubr.f32.mxu0 0.0
    %616 = vmatmul.mubr.f32.gmra.mrb[0].mxu0 %v549
    %v617 = vpop.f32.mrb[0].mxu0
    %v618 = vadd.f32 0.0, %v617
    %v619 = vpop.f32.mrb[0].mxu0
    %620 = vdwg.mxu0
    %v621 = vadd.f32 %v545, %v618
    %v622 = vxor.u32 %v621, 2147483648
    %v623 = vmul.f32 %v622, 1.442695
    %v624 = vpow.pop %v623
    %v625 = vadd.f32 %v624, 1.0
    %v626 = vrcp.pop %v625
    %v627 = vmul.f32 1.0, %v626
    %v628 = vtanh.pop %v621
    %v629 = vmul.f32 %v627, %v537
    %631 = vrot.lane.b32.xlu0 %v628, 64
    %v632 = vpop.permute.xlu0 %631
    %v634 = vmul.f32 %v627, %v632
    %636 = vrot.lane.b32.xlu0 %v634, 32
    %v637 = vpop.permute.xlu0 %636
    %v639 = vadd.f32 %v629, %v637
    %v640 = vtanh.pop %v639
    %642 = vrot.lane.b32.xlu0 %v640, 64
    %v643 = vpop.permute.xlu0 %642
    %v645 = vmul.f32 %v627, %v643
    %s646 = scalar_lea.vmem [#allocation3], 12
    %v647 = vld [vmem:[%s646] sm:$0x3]
    %649 = vrot.lane.b32.xlu0 %v645, 32
    %v650 = vpop.permute.xlu0 %649
    %v651 = vsel %vm37, %v650, 0
    %653 = vmatprep.subr.mxu0 0.0
    %654 = vmatpush1.msra.mxu0 %v32
    %655 = vmatprep.subr.mxu0 0.0
    %656 = vmatpush1.msra.mxu0 %v33
    %657 = vmatprep.subr.mxu0 0.0
    %658 = vmatpush1.msra.mxu0 %v34
    %659 = vmatprep.subr.mxu0 0.0
    %660 = vmatpush1.msra.mxu0 %v35
    %661 = vmatprep.subr.mxu0 0.0
    %662 = vmatpush1.msra.mxu0 0.0
    %663 = vmatprep.subr.mxu0 0.0
    %664 = vmatpush1.msra.mxu0 0.0
    %665 = vmatprep.subr.mxu0 0.0
    %666 = vmatpush1.msra.mxu0 0.0
    %667 = vmatprep.subr.mxu0 0.0
    %668 = vmatpush1.msra.mxu0 0.0
    %669 = vmatprep.subr.mxu0 0.0
    %670 = vmatpush1.msra.mxu0 0.0
    %671 = vmatprep.subr.mxu0 0.0
    %672 = vmatpush1.msra.mxu0 0.0
    %673 = vmatprep.subr.mxu0 0.0
    %674 = vmatpush1.msra.mxu0 0.0
    %675 = vmatprep.subr.mxu0 0.0
    %676 = vmatpush1.msra.mxu0 0.0
    %677 = vmatprep.subr.mxu0 0.0
    %678 = vmatpush1.msra.mxu0 0.0
    %679 = vmatprep.subr.mxu0 0.0
    %680 = vmatpush1.msra.mxu0 0.0
    %681 = vmatprep.subr.mxu0 0.0
    %682 = vmatpush1.msra.mxu0 0.0
    %683 = vmatprep.subr.mxu0 0.0
    %684 = vmatpush1.msra.mxu0 0.0
    %685 = vmatprep.subr.mxu0 0.0
    %686 = vmatpush1.msra.mxu0 0.0
    %687 = vmatprep.subr.mxu0 0.0
    %688 = vmatpush1.msra.mxu0 0.0
    %689 = vmatprep.subr.mxu0 0.0
    %690 = vmatpush1.msra.mxu0 0.0
    %691 = vmatprep.subr.mxu0 0.0
    %692 = vmatpush1.msra.mxu0 0.0
    %693 = vmatprep.subr.mxu0 0.0
    %694 = vmatpush1.msra.mxu0 0.0
    %695 = vmatprep.subr.mxu0 0.0
    %696 = vmatpush1.msra.mxu0 0.0
    %697 = vmatprep.subr.mxu0 0.0
    %698 = vmatpush1.msra.mxu0 0.0
    %699 = vmatprep.subr.mxu0 0.0
    %700 = vmatpush1.msra.mxu0 0.0
    %701 = vmatprep.subr.mxu0 0.0
    %702 = vmatpush1.msra.mxu0 0.0
    %703 = vmatprep.subr.mxu0 0.0
    %704 = vmatpush1.msra.mxu0 0.0
    %705 = vmatprep.subr.mxu0 0.0
    %706 = vmatpush1.msra.mxu0 0.0
    %707 = vmatprep.subr.mxu0 0.0
    %708 = vmatpush1.msra.mxu0 0.0
    %709 = vmatprep.subr.mxu0 0.0
    %710 = vmatpush1.msra.mxu0 0.0
    %711 = vmatprep.subr.mxu0 0.0
    %712 = vmatpush1.msra.mxu0 0.0
    %713 = vmatprep.subr.mxu0 0.0
    %714 = vmatpush1.msra.mxu0 0.0
    %715 = vmatprep.subr.mxu0 0.0
    %716 = vmatpush1.msra.mxu0 0.0
    %717 = vmatprep.mubr.f32.mxu0 0.0
    %718 = vmatmul.mubr.f32.gmra.mrb[0].mxu0 %v651
    %v719 = vpop.f32.mrb[0].mxu0
    %v720 = vadd.f32 0.0, %v719
    %v721 = vpop.f32.mrb[0].mxu0
    %722 = vdwg.mxu0
    %v723 = vadd.f32 %v647, %v720
    %v724 = vxor.u32 %v723, 2147483648
    %v725 = vmul.f32 %v724, 1.442695
    %v726 = vpow.pop %v725
    %v727 = vadd.f32 %v726, 1.0
    %v728 = vrcp.pop %v727
    %v729 = vmul.f32 1.0, %v728
    %v730 = vtanh.pop %v723
    %v731 = vmul.f32 %v729, %v639
    %733 = vrot.lane.b32.xlu0 %v730, 64
    %v734 = vpop.permute.xlu0 %733
    %v736 = vmul.f32 %v729, %v734
    %738 = vrot.lane.b32.xlu0 %v736, 32
    %v739 = vpop.permute.xlu0 %738
    %v741 = vadd.f32 %v731, %v739
    %v742 = vtanh.pop %v741
    %744 = vrot.lane.b32.xlu0 %v742, 64
    %v745 = vpop.permute.xlu0 %744
    %v747 = vmul.f32 %v729, %v745
    %s748 = scalar_lea.vmem [#allocation3], 14
    %v749 = vld [vmem:[%s748] sm:$0x3]
    %751 = vrot.lane.b32.xlu0 %v747, 32
    %v752 = vpop.permute.xlu0 %751
    %v753 = vsel %vm37, %v752, 0
    %755 = vmatprep.subr.mxu0 0.0
    %756 = vmatpush1.msra.mxu0 %v32
    %757 = vmatprep.subr.mxu0 0.0
    %758 = vmatpush1.msra.mxu0 %v33
    %759 = vmatprep.subr.mxu0 0.0
    %760 = vmatpush1.msra.mxu0 %v34
    %761 = vmatprep.subr.mxu0 0.0
    %762 = vmatpush1.msra.mxu0 %v35
    %763 = vmatprep.subr.mxu0 0.0
    %764 = vmatpush1.msra.mxu0 0.0
    %765 = vmatprep.subr.mxu0 0.0
    %766 = vmatpush1.msra.mxu0 0.0
    %767 = vmatprep.subr.mxu0 0.0
    %768 = vmatpush1.msra.mxu0 0.0
    %769 = vmatprep.subr.mxu0 0.0
    %770 = vmatpush1.msra.mxu0 0.0
    %771 = vmatprep.subr.mxu0 0.0
    %772 = vmatpush1.msra.mxu0 0.0
    %773 = vmatprep.subr.mxu0 0.0
    %774 = vmatpush1.msra.mxu0 0.0
    %775 = vmatprep.subr.mxu0 0.0
    %776 = vmatpush1.msra.mxu0 0.0
    %777 = vmatprep.subr.mxu0 0.0
    %778 = vmatpush1.msra.mxu0 0.0
    %779 = vmatprep.subr.mxu0 0.0
    %780 = vmatpush1.msra.mxu0 0.0
    %781 = vmatprep.subr.mxu0 0.0
    %782 = vmatpush1.msra.mxu0 0.0
    %783 = vmatprep.subr.mxu0 0.0
    %784 = vmatpush1.msra.mxu0 0.0
    %785 = vmatprep.subr.mxu0 0.0
    %786 = vmatpush1.msra.mxu0 0.0
    %787 = vmatprep.subr.mxu0 0.0
    %788 = vmatpush1.msra.mxu0 0.0
    %789 = vmatprep.subr.mxu0 0.0
    %790 = vmatpush1.msra.mxu0 0.0
    %791 = vmatprep.subr.mxu0 0.0
    %792 = vmatpush1.msra.mxu0 0.0
    %793 = vmatprep.subr.mxu0 0.0
    %794 = vmatpush1.msra.mxu0 0.0
    %795 = vmatprep.subr.mxu0 0.0
    %796 = vmatpush1.msra.mxu0 0.0
    %797 = vmatprep.subr.mxu0 0.0
    %798 = vmatpush1.msra.mxu0 0.0
    %799 = vmatprep.subr.mxu0 0.0
    %800 = vmatpush1.msra.mxu0 0.0
    %801 = vmatprep.subr.mxu0 0.0
    %802 = vmatpush1.msra.mxu0 0.0
    %803 = vmatprep.subr.mxu0 0.0
    %804 = vmatpush1.msra.mxu0 0.0
    %805 = vmatprep.subr.mxu0 0.0
    %806 = vmatpush1.msra.mxu0 0.0
    %807 = vmatprep.subr.mxu0 0.0
    %808 = vmatpush1.msra.mxu0 0.0
    %809 = vmatprep.subr.mxu0 0.0
    %810 = vmatpush1.msra.mxu0 0.0
    %811 = vmatprep.subr.mxu0 0.0
    %812 = vmatpush1.msra.mxu0 0.0
    %813 = vmatprep.subr.mxu0 0.0
    %814 = vmatpush1.msra.mxu0 0.0
    %815 = vmatprep.subr.mxu0 0.0
    %816 = vmatpush1.msra.mxu0 0.0
    %817 = vmatprep.subr.mxu0 0.0
    %818 = vmatpush1.msra.mxu0 0.0
    %819 = vmatprep.mubr.f32.mxu0 0.0
    %820 = vmatmul.mubr.f32.gmra.mrb[0].mxu0 %v753
    %v821 = vpop.f32.mrb[0].mxu0
    %v822 = vadd.f32 0.0, %v821
    %v823 = vpop.f32.mrb[0].mxu0
    %824 = vdwg.mxu0
    %v825 = vadd.f32 %v749, %v822
    %v826 = vxor.u32 %v825, 2147483648
    %v827 = vmul.f32 %v826, 1.442695
    %v828 = vpow.pop %v827
    %v829 = vadd.f32 %v828, 1.0
    %v830 = vrcp.pop %v829
    %v831 = vmul.f32 1.0, %v830
    %v832 = vtanh.pop %v825
    %v833 = vmul.f32 %v831, %v741
    %835 = vrot.lane.b32.xlu0 %v832, 64
    %v836 = vpop.permute.xlu0 %835
    %v838 = vmul.f32 %v831, %v836
    %840 = vrot.lane.b32.xlu0 %v838, 32
    %v841 = vpop.permute.xlu0 %840
    %v843 = vadd.f32 %v833, %v841
    %v844 = vtanh.pop %v843
    %846 = vrot.lane.b32.xlu0 %v844, 64
    %v847 = vpop.permute.xlu0 %846
    %v849 = vmul.f32 %v831, %v847
    %v850 = vld [vmem:[%s2] sm:$0xff]
    %v851 = vld [vmem:[%s2 + $0x8] sm:$0xff]
    %v852 = vld [vmem:[%s2 + $0x10] sm:$0xff]
    %v853 = vld [vmem:[%s2 + $0x18] sm:$0xff]
    %s854 = sld [smem:[#allocation2]]
    %v855 = vstv %s854
    %857 = vrot.lane.b32.xlu0 %v849, 32
    %v858 = vpop.permute.xlu0 %857
    %v859 = vsel %vm37, %v858, 0
    %861 = vmatprep.subr.mxu0 0.0
    %862 = vmatpush1.msra.mxu0 %v850
    %863 = vmatprep.subr.mxu0 0.0
    %864 = vmatpush1.msra.mxu0 %v851
    %865 = vmatprep.subr.mxu0 0.0
    %866 = vmatpush1.msra.mxu0 %v852
    %867 = vmatprep.subr.mxu0 0.0
    %868 = vmatpush1.msra.mxu0 %v853
    %869 = vmatprep.subr.mxu0 0.0
    %870 = vmatpush1.msra.mxu0 0.0
    %871 = vmatprep.subr.mxu0 0.0
    %872 = vmatpush1.msra.mxu0 0.0
    %873 = vmatprep.subr.mxu0 0.0
    %874 = vmatpush1.msra.mxu0 0.0
    %875 = vmatprep.subr.mxu0 0.0
    %876 = vmatpush1.msra.mxu0 0.0
    %877 = vmatprep.subr.mxu0 0.0
    %878 = vmatpush1.msra.mxu0 0.0
    %879 = vmatprep.subr.mxu0 0.0
    %880 = vmatpush1.msra.mxu0 0.0
    %881 = vmatprep.subr.mxu0 0.0
    %882 = vmatpush1.msra.mxu0 0.0
    %883 = vmatprep.subr.mxu0 0.0
    %884 = vmatpush1.msra.mxu0 0.0
    %885 = vmatprep.subr.mxu0 0.0
    %886 = vmatpush1.msra.mxu0 0.0
    %887 = vmatprep.subr.mxu0 0.0
    %888 = vmatpush1.msra.mxu0 0.0
    %889 = vmatprep.subr.mxu0 0.0
    %890 = vmatpush1.msra.mxu0 0.0
    %891 = vmatprep.subr.mxu0 0.0
    %892 = vmatpush1.msra.mxu0 0.0
    %893 = vmatprep.subr.mxu0 0.0
    %894 = vmatpush1.msra.mxu0 0.0
    %895 = vmatprep.subr.mxu0 0.0
    %896 = vmatpush1.msra.mxu0 0.0
    %897 = vmatprep.subr.mxu0 0.0
    %898 = vmatpush1.msra.mxu0 0.0
    %899 = vmatprep.subr.mxu0 0.0
    %900 = vmatpush1.msra.mxu0 0.0
    %901 = vmatprep.subr.mxu0 0.0
    %902 = vmatpush1.msra.mxu0 0.0
    %903 = vmatprep.subr.mxu0 0.0
    %904 = vmatpush1.msra.mxu0 0.0
    %905 = vmatprep.subr.mxu0 0.0
    %906 = vmatpush1.msra.mxu0 0.0
    %907 = vmatprep.subr.mxu0 0.0
    %908 = vmatpush1.msra.mxu0 0.0
    %909 = vmatprep.subr.mxu0 0.0
    %910 = vmatpush1.msra.mxu0 0.0
    %911 = vmatprep.subr.mxu0 0.0
    %912 = vmatpush1.msra.mxu0 0.0
    %913 = vmatprep.subr.mxu0 0.0
    %914 = vmatpush1.msra.mxu0 0.0
    %915 = vmatprep.subr.mxu0 0.0
    %916 = vmatpush1.msra.mxu0 0.0
    %917 = vmatprep.subr.mxu0 0.0
    %918 = vmatpush1.msra.mxu0 0.0
    %919 = vmatprep.subr.mxu0 0.0
    %920 = vmatpush1.msra.mxu0 0.0
    %921 = vmatprep.subr.mxu0 0.0
    %922 = vmatpush1.msra.mxu0 0.0
    %923 = vmatprep.subr.mxu0 0.0
    %924 = vmatpush1.msra.mxu0 0.0
    %925 = vmatprep.mubr.f32.mxu0 0.0
    %926 = vmatmul.mubr.f32.gmra.mrb[0].mxu0 %v859
    %v927 = vpop.f32.mrb[0].mxu0
    %v928 = vadd.f32 %v855, %v927
    %v929 = vpop.f32.mrb[0].mxu0
    %930 = vdwg.mxu0
    %vm931 = vcmask 1024
    %932 = vst.msk [vmem:[%s4] sm:$0x3] %vm931, %v928
    // Predicated region
    $region22: #{tpu_custom_call.1} parent=1 // pred_check
      _
    $region23: #{tpu_custom_call.1} parent=1 // pred_check_branch
      %934 = sbr.rel (0) target = $region25
    $region24: #{tpu_custom_call.1} parent=1 // pred_region
      _
    $region25: #{tpu_custom_call.1} parent=1 // pred_fallthru
      _
    // Predicated region
    $region26: #{tpu_custom_call.1} parent=1 // pred_check
      _
    $region27: #{tpu_custom_call.1} parent=1 // pred_check_branch
      %936 = sbr.rel (0) target = $region29
    $region28: #{tpu_custom_call.1} parent=1 // pred_region
      _
    $region29: #{tpu_custom_call.1} parent=1 // pred_fallthru
      _
    %937 = vsyncpa [#allocation4], 1

</llo_original>
